<compile_context>
chip_gen: v6e
topology: v6e:2x2x1
jax: 0.10.0
libtpu: 0.0.40
codegen_flags: <defaults>
</compile_context>

<pallas_src>
import jax
import jax.numpy as jnp
from jax.experimental import pallas as pl
from jax.experimental.pallas import tpu as pltpu


def _round_up(x, m):
    return ((x + m - 1) // m) * m


# ----------------------------------------------------------------------------
# fused 2-phase kernel: IoU + per-gt max (phase 0), labels + offsets (phase 1)
# ----------------------------------------------------------------------------
def _anchor_target_kernel(pf_ref, pi_ref, anchors_ref, gt_ref,
                          label_ref, offset_ref, gt_max_sc):
    phase = pl.program_id(0)
    tile = pl.program_id(1)

    img_h = pf_ref[0]
    img_w = pf_ref[1]
    pos_thresh = pf_ref[2]
    neg_thresh = pf_ref[3]
    n_gt = pi_ref[0]

    a = anchors_ref[...]                     # (4, TILE_N)
    g = gt_ref[...]                          # (K_pad, 4)
    k = g.shape[0]

    ax1, ay1, ax2, ay2 = a[0:1, :], a[1:2, :], a[2:3, :], a[3:4, :]   # (1, T)
    # anchor fully inside the image (matches the torch filter)
    inside = ((ax1 >= 0.0) & (ay1 >= 0.0)
              & (ax2 <= img_w) & (ay2 <= img_h))                      # (1, T)

    gx1, gy1, gx2, gy2 = g[:, 0:1], g[:, 1:2], g[:, 2:3], g[:, 3:4]   # (K, 1)
    ix1 = jnp.maximum(gx1, ax1)
    iy1 = jnp.maximum(gy1, ay1)
    ix2 = jnp.minimum(gx2, ax2)
    iy2 = jnp.minimum(gy2, ay2)
    inter = jnp.maximum(ix2 - ix1, 0.0) * jnp.maximum(iy2 - iy1, 0.0)  # (K, T)
    area_a = (ax2 - ax1) * (ay2 - ay1)                                 # (1, T)
    area_g = (gx2 - gx1) * (gy2 - gy1)                                 # (K, 1)
    union = area_a + area_g - inter + jnp.float32(1e-8)
    # TODO(synk): exact cal_IoU helper not shown in source; standard IoU used.
    iou = inter * pl.reciprocal(union, approx=True)                    # (K, T)
    # TODO(synk): for K_pad > ~32, chunk the gt (sublane) axis with a
    # lax.fori_loop(unroll=True) carrying running maxima to cap vreg pressure.

    # ---- phase 0: accumulate per-gt max IoU over inside anchors ------------
    @pl.when((phase == 0) & (tile == 0))
    def _():
        gt_max_sc[...] = jnp.full(gt_max_sc.shape, -1.0, jnp.float32)

    @pl.when(phase == 0)
    def _():
        tile_gt_max = jnp.max(jnp.where(inside, iou, -1.0),
                              axis=1, keepdims=True)                   # (K, 1)
        gt_max_sc[...] = jnp.maximum(gt_max_sc[...], tile_gt_max)

    # ---- phase 1: labels + bbox regression targets -------------------------
    @pl.when(phase == 1)
    def _():
        # padded gt rows get an unreachable value so they never claim
        # positives through the equality rule.
        gt_row = jax.lax.broadcasted_iota(jnp.int32, (k, 1), 0)        # (K, 1)
        gt_valid = gt_row < n_gt
        gt_max = jnp.where(gt_valid, gt_max_sc[...], 2.0)              # (K, 1)
        is_gt_max = jnp.max(jnp.where(iou == gt_max, 1.0, 0.0),
                            axis=0, keepdims=True) > 0.0               # (1, T)

        # per-anchor max / argmax over gts (first index achieving the max,
        # matching torch argmax(dim=1))
        pa_max = jnp.max(iou, axis=0, keepdims=True)                   # (1, T)
        k_iota = jax.lax.broadcasted_iota(jnp.int32, iou.shape, 0)     # (K, T)
        argmax = jnp.min(jnp.where(iou == pa_max, k_iota, k),
                         axis=0, keepdims=True)                        # (1, T)

        pos = is_gt_max | (pa_max >= pos_thresh)
        neg = pa_max <= neg_thresh          # spec uses <= for negatives
        lab = jnp.where(neg, 0, -1)
        lab = jnp.where(pos, 1, lab)
        lab = jnp.where(inside, lab, -1)    # outside / pad anchors -> -1
        label_ref[...] = lab.astype(jnp.int32)

        # matched gt box per anchor via exact f32 masked sublane select-reduce
        # (argmax is unique per column, so max-of-masked is an exact gather).
        sel = k_iota == argmax                                         # (K, T)
        neg_big = jnp.float32(-3.4e38)
        mx1 = jnp.max(jnp.where(sel, gx1, neg_big), axis=0, keepdims=True)
        my1 = jnp.max(jnp.where(sel, gy1, neg_big), axis=0, keepdims=True)
        mx2 = jnp.max(jnp.where(sel, gx2, neg_big), axis=0, keepdims=True)
        my2 = jnp.max(jnp.where(sel, gy2, neg_big), axis=0, keepdims=True)

        eps = jnp.float32(1e-8)
        aw, ah = ax2 - ax1, ay2 - ay1
        acx, acy = ax1 + 0.5 * aw, ay1 + 0.5 * ah
        gw, gh = mx2 - mx1, my2 - my1
        gcx, gcy = mx1 + 0.5 * gw, my1 + 0.5 * gh
        inv_aw = pl.reciprocal(jnp.maximum(aw, eps), approx=True)
        inv_ah = pl.reciprocal(jnp.maximum(ah, eps), approx=True)
        # TODO(synk): cal_offset_scale not shown in source; standard
        # (dx, dy, dw, dh) R-CNN encoding assumed.
        dx = (gcx - acx) * inv_aw
        dy = (gcy - acy) * inv_ah
        dw = jnp.log(jnp.maximum(gw, eps) * inv_aw)
        dh = jnp.log(jnp.maximum(gh, eps) * inv_ah)
        zero = jnp.zeros_like(dx)
        # outside anchors -> 0; write each coordinate row directly
        offset_ref[0:1, :] = jnp.where(inside, dx, zero)
        offset_ref[1:2, :] = jnp.where(inside, dy, zero)
        offset_ref[2:3, :] = jnp.where(inside, dw, zero)
        offset_ref[3:4, :] = jnp.where(inside, dh, zero)


# ----------------------------------------------------------------------------
# glue: one-time anchor prep, pallas_call plumbing, random subsampling
# ----------------------------------------------------------------------------
def prepare_anchors(anchors, tile_n=8192):
    """Pad + transpose anchors once (anchors are static per feature map).

    Returns (anchors_t: (4, N_pad) f32, n_anchor, tile_n_actual)."""
    n_anchor = int(anchors.shape[0])
    n_pad128 = _round_up(n_anchor, 128)
    tile_n = min(_round_up(int(tile_n), 128), n_pad128)
    n_pad = _round_up(n_pad128, tile_n)
    af = anchors.astype(jnp.float32)
    if n_pad > n_anchor:
        # padded anchors sit far outside the image (zero area) -> masked out
        pad_box = jnp.full((n_pad - n_anchor, 4), -1e4, jnp.float32)
        af = jnp.concatenate([af, pad_box], axis=0)
    return af.T, n_anchor, tile_n


def _subsample(label, key, target_label, max_keep, k_static):
    """Randomly keep at most max_keep entries of target_label, rest -> -1."""
    is_t = label == target_label
    count = jnp.sum(is_t)
    rand = jax.random.uniform(key, label.shape)
    scores = jnp.where(is_t, rand, -jnp.inf)
    # top_k (k <= n_sample) instead of a full argsort over all anchors.
    # TODO(synk): torch.multinomial(idx.float(), n) weights removal by index
    # value; that quirk is not reproduced (uniform draw w/o replacement).
    _, top_idx = jax.lax.top_k(scores, k_static)
    keep = jnp.zeros(label.shape, jnp.bool_).at[top_idx].set(
        jnp.arange(k_static) < max_keep)
    new_label = jnp.where(is_t & ~keep, -1, label)
    return jnp.where(count > max_keep, new_label, label)


def anchor_target_layer(gt_bbox, anchors_t, n_anchor, tile_n, img_size, key,
                        n_sample=256, pos_iou_thresh=0.7,
                        neg_iou_thresh=0.3, pos_ratio=0.5):
    img_h, img_w = float(img_size[0]), float(img_size[1])
    n_pad = int(anchors_t.shape[1])
    n_tiles = n_pad // tile_n
    n_gt = int(gt_bbox.shape[0])
    k_pad = max(_round_up(n_gt, 8), 8)           # sublane alignment

    gt = gt_bbox.astype(jnp.float32)
    if k_pad > n_gt:
        # padded gt boxes are zero-area and far away -> IoU exactly 0
        pad_gt = jnp.full((k_pad - n_gt, 4), -2e4, jnp.float32)
        gt = jnp.concatenate([gt, pad_gt], axis=0)    # (K_pad, 4)

    # runtime scalars live in SMEM -> no recompile when image size changes
    params_f = jnp.array([img_h, img_w, pos_iou_thresh, neg_iou_thresh],
                         jnp.float32)
    params_i = jnp.array([n_gt], jnp.int32)

    label_t, offset_t = pl.pallas_call(
        _anchor_target_kernel,
        grid=(2, n_tiles),                       # (phase, anchor tile)
        in_specs=[
            pl.BlockSpec(memory_space=pltpu.MemorySpace.SMEM),
            pl.BlockSpec(memory_space=pltpu.MemorySpace.SMEM),
            pl.BlockSpec((4, tile_n), lambda p, t: (0, t)),
            pl.BlockSpec((k_pad, 4), lambda p, t: (0, 0)),
        ],
        out_specs=(
            pl.BlockSpec((1, tile_n), lambda p, t: (0, t)),
            pl.BlockSpec((4, tile_n), lambda p, t: (0, t)),
        ),
        out_shape=(jax.ShapeDtypeStruct((1, n_pad), jnp.int32),
                   jax.ShapeDtypeStruct((4, n_pad), jnp.float32)),
        scratch_shapes=[pltpu.VMEM((k_pad, 1), jnp.float32)],
        compiler_params=pltpu.CompilerParams(
            # phase axis is a cross-tile reduction into a shared scratch;
            # keep both axes "arbitrary" (single-core-safe on v7x).
            dimension_semantics=("arbitrary", "arbitrary"),
            vmem_limit_bytes=32 * 1024 * 1024),
    )(params_f, params_i, anchors_t, gt)

    label = label_t[0, :n_anchor]                     # (N,) int32
    offset_scale = offset_t[:, :n_anchor].T           # (N, 4) float32
    # TODO(synk): downstream consumers could keep the (4, N) layout and skip
    # this wrapper-side transpose entirely.

    # subsampling of positives / negatives (plain-JAX glue)
    k_pos, k_neg = jax.random.split(key)
    positive_num = int(round(n_sample * pos_ratio))
    label = _subsample(label, k_pos, 1, positive_num,
                       min(positive_num, n_anchor))
    negative_num = n_sample - jnp.sum(label == 1)
    label = _subsample(label, k_neg, 0, negative_num,
                       min(n_sample, n_anchor))

    return offset_scale, label


if __name__ == "__main__":
    key = jax.random.PRNGKey(0)
    k1, k2, k3, k4, ksub = jax.random.split(key, 5)

    img_size = (128.0, 128.0)        # (H, W)
    n_anchor, n_gt = 600, 8

    # anchors (N, 4) = (x1, y1, x2, y2); some straddle the image border
    ctr = jax.random.uniform(k1, (n_anchor, 2), minval=-8.0, maxval=136.0)
    wh = jax.random.uniform(k2, (n_anchor, 2), minval=8.0, maxval=64.0)
    anchors = jnp.concatenate([ctr - 0.5 * wh, ctr + 0.5 * wh], axis=1)

    # gt boxes (K, 4) inside the image
    g_tl = jax.random.uniform(k3, (n_gt, 2), minval=0.0, maxval=80.0)
    g_wh = jax.random.uniform(k4, (n_gt, 2), minval=16.0, maxval=48.0)
    gt_bbox = jnp.concatenate([g_tl, jnp.minimum(g_tl + g_wh, 127.0)], axis=1)

    # anchors are static per feature map -> prep (pad + transpose) once.
    # small tile_n here exercises the multi-tile 2-phase grid (grid=(2,3)).
    anchors_t, n_real, tile_n = prepare_anchors(anchors, tile_n=256)

    offset_scale, label = anchor_target_layer(
        gt_bbox, anchors_t, n_real, tile_n, img_size, ksub)
    offset_scale, label = jax.block_until_ready((offset_scale, label))

    assert offset_scale.shape == (n_anchor, 4) and offset_scale.dtype == jnp.float32
    assert label.shape == (n_anchor,) and label.dtype == jnp.int32
    assert bool(jnp.all(jnp.isfinite(offset_scale)))
    print("KERNEL_OK")
</pallas_src>

<mosaic_0001>
module attributes {stable_mosaic.version = 11 : i64} {
  func.func @_anchor_target_kernel(%arg0: i32, %arg1: i32, %arg2: memref<4xf32, #tpu.memory_space<smem>>, %arg3: memref<1xi32, #tpu.memory_space<smem>>, %arg4: memref<4x256xf32, #tpu.memory_space<vmem>>, %arg5: memref<8x4xf32, #tpu.memory_space<vmem>>, %arg6: memref<1x256xi32, #tpu.memory_space<vmem>>, %arg7: memref<4x256xf32, #tpu.memory_space<vmem>>, %arg8: memref<8x1xf32, #tpu.memory_space<vmem>>) attributes {dimension_semantics = [#tpu.dimension_semantics<arbitrary>, #tpu.dimension_semantics<arbitrary>], iteration_bounds = array<i64: 2, 3>, scalar_prefetch = 0 : i64, scratch_operands = 1 : i64, tpu.core_type = #tpu.core_type<tc>, window_params = [{transform_indices = @transform_0, window_bounds = array<i64: 4>}, {transform_indices = @transform_1, window_bounds = array<i64: 1>}, {transform_indices = @transform_2, window_bounds = array<i64: 4, 256>}, {pipeline_mode = #tpu.pipeline_mode<synchronous>, transform_indices = @transform_3, window_bounds = array<i64: 8, 4>}, {transform_indices = @transform_4, window_bounds = array<i64: 1, 256>}, {transform_indices = @transform_5, window_bounds = array<i64: 4, 256>}]} {
    %c0 = arith.constant 0 : index
    %0 = memref.load %arg2[%c0] : memref<4xf32, #tpu.memory_space<smem>>
    %c1 = arith.constant 1 : index
    %1 = memref.load %arg2[%c1] : memref<4xf32, #tpu.memory_space<smem>>
    %c2 = arith.constant 2 : index
    %2 = memref.load %arg2[%c2] : memref<4xf32, #tpu.memory_space<smem>>
    %c3 = arith.constant 3 : index
    %3 = memref.load %arg2[%c3] : memref<4xf32, #tpu.memory_space<smem>>
    %c0_0 = arith.constant 0 : index
    %4 = memref.load %arg3[%c0_0] : memref<1xi32, #tpu.memory_space<smem>>
    %c0_1 = arith.constant 0 : index
    %c0_2 = arith.constant 0 : index
    %5 = vector.load %arg4[%c0_1, %c0_2] : memref<4x256xf32, #tpu.memory_space<vmem>>, vector<4x256xf32>
    %c0_3 = arith.constant 0 : index
    %c0_4 = arith.constant 0 : index
    %6 = vector.load %arg5[%c0_3, %c0_4] : memref<8x4xf32, #tpu.memory_space<vmem>>, vector<8x4xf32>
    %7 = vector.extract_strided_slice %5 {offsets = [0, 0], sizes = [1, 256], strides = [1, 1]} : vector<4x256xf32> to vector<1x256xf32>
    %8 = vector.extract_strided_slice %5 {offsets = [1, 0], sizes = [1, 256], strides = [1, 1]} : vector<4x256xf32> to vector<1x256xf32>
    %9 = vector.extract_strided_slice %5 {offsets = [2, 0], sizes = [1, 256], strides = [1, 1]} : vector<4x256xf32> to vector<1x256xf32>
    %10 = vector.extract_strided_slice %5 {offsets = [3, 0], sizes = [1, 256], strides = [1, 1]} : vector<4x256xf32> to vector<1x256xf32>
    %cst = arith.constant 0.000000e+00 : f32
    %11 = vector.broadcast %cst : f32 to vector<1x256xf32>
    %12 = arith.cmpf oge, %7, %11 : vector<1x256xf32>
    %cst_5 = arith.constant 0.000000e+00 : f32
    %13 = vector.broadcast %cst_5 : f32 to vector<1x256xf32>
    %14 = arith.cmpf oge, %8, %13 : vector<1x256xf32>
    %15 = arith.andi %12, %14 : vector<1x256xi1>
    %16 = vector.broadcast %1 : f32 to vector<1x256xf32>
    %17 = arith.cmpf ole, %9, %16 : vector<1x256xf32>
    %18 = arith.andi %15, %17 : vector<1x256xi1>
    %19 = vector.broadcast %0 : f32 to vector<1x256xf32>
    %20 = arith.cmpf ole, %10, %19 : vector<1x256xf32>
    %21 = arith.andi %18, %20 : vector<1x256xi1>
    %22 = vector.extract_strided_slice %6 {offsets = [0, 0], sizes = [8, 1], strides = [1, 1]} : vector<8x4xf32> to vector<8x1xf32>
    %23 = vector.extract_strided_slice %6 {offsets = [0, 1], sizes = [8, 1], strides = [1, 1]} : vector<8x4xf32> to vector<8x1xf32>
    %24 = vector.extract_strided_slice %6 {offsets = [0, 2], sizes = [8, 1], strides = [1, 1]} : vector<8x4xf32> to vector<8x1xf32>
    %25 = vector.extract_strided_slice %6 {offsets = [0, 3], sizes = [8, 1], strides = [1, 1]} : vector<8x4xf32> to vector<8x1xf32>
    %26 = vector.broadcast %22 : vector<8x1xf32> to vector<8x256xf32>
    %27 = vector.broadcast %7 : vector<1x256xf32> to vector<8x256xf32>
    %28 = arith.maximumf %26, %27 : vector<8x256xf32>
    %29 = vector.broadcast %23 : vector<8x1xf32> to vector<8x256xf32>
    %30 = vector.broadcast %8 : vector<1x256xf32> to vector<8x256xf32>
    %31 = arith.maximumf %29, %30 : vector<8x256xf32>
    %32 = vector.broadcast %24 : vector<8x1xf32> to vector<8x256xf32>
    %33 = vector.broadcast %9 : vector<1x256xf32> to vector<8x256xf32>
    %34 = arith.minimumf %32, %33 : vector<8x256xf32>
    %35 = vector.broadcast %25 : vector<8x1xf32> to vector<8x256xf32>
    %36 = vector.broadcast %10 : vector<1x256xf32> to vector<8x256xf32>
    %37 = arith.minimumf %35, %36 : vector<8x256xf32>
    %38 = arith.subf %34, %28 : vector<8x256xf32>
    %cst_6 = arith.constant 0.000000e+00 : f32
    %39 = vector.broadcast %cst_6 : f32 to vector<8x256xf32>
    %40 = arith.maximumf %38, %39 : vector<8x256xf32>
    %41 = arith.subf %37, %31 : vector<8x256xf32>
    %cst_7 = arith.constant 0.000000e+00 : f32
    %42 = vector.broadcast %cst_7 : f32 to vector<8x256xf32>
    %43 = arith.maximumf %41, %42 : vector<8x256xf32>
    %44 = arith.mulf %40, %43 : vector<8x256xf32>
    %45 = arith.subf %9, %7 : vector<1x256xf32>
    %46 = arith.subf %10, %8 : vector<1x256xf32>
    %47 = arith.mulf %45, %46 : vector<1x256xf32>
    %48 = arith.subf %24, %22 : vector<8x1xf32>
    %49 = arith.subf %25, %23 : vector<8x1xf32>
    %50 = arith.mulf %48, %49 : vector<8x1xf32>
    %51 = vector.broadcast %47 : vector<1x256xf32> to vector<8x256xf32>
    %52 = vector.broadcast %50 : vector<8x1xf32> to vector<8x256xf32>
    %53 = arith.addf %51, %52 : vector<8x256xf32>
    %54 = arith.subf %53, %44 : vector<8x256xf32>
    %cst_8 = arith.constant 9.99999993E-9 : f32
    %55 = vector.broadcast %cst_8 : f32 to vector<8x256xf32>
    %56 = arith.addf %54, %55 : vector<8x256xf32>
    %57 = tpu.reciprocal %56 {approx = true} : vector<8x256xf32> -> vector<8x256xf32>
    %58 = arith.mulf %44, %57 : vector<8x256xf32>
    %c0_i32 = arith.constant 0 : i32
    %59 = arith.cmpi eq, %arg0, %c0_i32 : i32
    %c0_i32_9 = arith.constant 0 : i32
    %60 = arith.cmpi eq, %arg1, %c0_i32_9 : i32
    %61 = arith.andi %59, %60 : i1
    %62 = arith.extui %61 : i1 to i32
    %c0_i32_10 = arith.constant 0 : i32
    %63 = arith.cmpi ne, %62, %c0_i32_10 : i32
    scf.if %63 {
      %cst_14 = arith.constant -1.000000e+00 : f32
      %70 = vector.broadcast %cst_14 : f32 to vector<8x1xf32>
      %c0_15 = arith.constant 0 : index
      %c0_16 = arith.constant 0 : index
      %71 = vector.load %arg8[%c0_15, %c0_16] : memref<8x1xf32, #tpu.memory_space<vmem>>, vector<8x1xf32>
      tpu.vector_store %arg8[%c0_15, %c0_16], %70 {strides = array<i32>} : memref<8x1xf32, #tpu.memory_space<vmem>>, vector<8x1xf32>,
    } else {
    }
    %c0_i32_11 = arith.constant 0 : i32
    %64 = arith.cmpi eq, %arg0, %c0_i32_11 : i32
    %65 = arith.extui %64 : i1 to i32
    %c0_i32_12 = arith.constant 0 : i32
    %66 = arith.cmpi ne, %65, %c0_i32_12 : i32
    scf.if %66 {
      %cst_14 = arith.constant -1.000000e+00 : f32
      %70 = vector.shape_cast %21 : vector<1x256xi1> to vector<1x256xi1>
      %71 = vector.broadcast %70 : vector<1x256xi1> to vector<8x256xi1>
      %72 = vector.broadcast %cst_14 : f32 to vector<8x256xf32>
      %73 = arith.select %71, %58, %72 : vector<8x256xi1>, vector<8x256xf32>
      %cst_15 = arith.constant dense<0xFF800000> : vector<8xf32>
      %74 = vector.multi_reduction <maximumf>, %73, %cst_15 [1] : vector<8x256xf32> to vector<8xf32>
      %75 = vector.shape_cast %74 : vector<8xf32> to vector<8x1xf32>
      %c0_16 = arith.constant 0 : index
      %c0_17 = arith.constant 0 : index
      %76 = vector.load %arg8[%c0_16, %c0_17] : memref<8x1xf32, #tpu.memory_space<vmem>>, vector<8x1xf32>
      %77 = arith.maximumf %76, %75 : vector<8x1xf32>
      %c0_18 = arith.constant 0 : index
      %c0_19 = arith.constant 0 : index
      %78 = vector.load %arg8[%c0_18, %c0_19] : memref<8x1xf32, #tpu.memory_space<vmem>>, vector<8x1xf32>
      tpu.vector_store %arg8[%c0_18, %c0_19], %77 {strides = array<i32>} : memref<8x1xf32, #tpu.memory_space<vmem>>, vector<8x1xf32>,
    } else {
    }
    %c1_i32 = arith.constant 1 : i32
    %67 = arith.cmpi eq, %arg0, %c1_i32 : i32
    %68 = arith.extui %67 : i1 to i32
    %c0_i32_13 = arith.constant 0 : i32
    %69 = arith.cmpi ne, %68, %c0_i32_13 : i32
    scf.if %69 {
      %70 = tpu.iota {dimensions = array<i32: 0>} : vector<8x1xi32>
      %71 = vector.broadcast %4 : i32 to vector<8x1xi32>
      %72 = arith.cmpi slt, %70, %71 : vector<8x1xi32>
      %c0_14 = arith.constant 0 : index
      %c0_15 = arith.constant 0 : index
      %73 = vector.load %arg8[%c0_14, %c0_15] : memref<8x1xf32, #tpu.memory_space<vmem>>, vector<8x1xf32>
      %cst_16 = arith.constant 2.000000e+00 : f32
      %74 = vector.broadcast %cst_16 : f32 to vector<8x1xf32>
      %75 = arith.select %72, %73, %74 : vector<8x1xi1>, vector<8x1xf32>
      %76 = vector.broadcast %75 : vector<8x1xf32> to vector<8x256xf32>
      %77 = arith.cmpf oeq, %58, %76 : vector<8x256xf32>
      %cst_17 = arith.constant 1.000000e+00 : f32
      %cst_18 = arith.constant 0.000000e+00 : f32
      %78 = vector.broadcast %cst_17 : f32 to vector<8x256xf32>
      %79 = vector.broadcast %cst_18 : f32 to vector<8x256xf32>
      %80 = arith.select %77, %78, %79 : vector<8x256xi1>, vector<8x256xf32>
      %cst_19 = arith.constant dense<0xFF800000> : vector<256xf32>
      %81 = vector.multi_reduction <maximumf>, %80, %cst_19 [0] : vector<8x256xf32> to vector<256xf32>
      %82 = vector.shape_cast %81 : vector<256xf32> to vector<1x256xf32>
      %cst_20 = arith.constant 0.000000e+00 : f32
      %83 = vector.broadcast %cst_20 : f32 to vector<1x256xf32>
      %84 = arith.cmpf ogt, %82, %83 : vector<1x256xf32>
      %cst_21 = arith.constant dense<0xFF800000> : vector<256xf32>
      %85 = vector.multi_reduction <maximumf>, %58, %cst_21 [0] : vector<8x256xf32> to vector<256xf32>
      %86 = vector.shape_cast %85 : vector<256xf32> to vector<1x256xf32>
      %87 = tpu.iota {dimensions = array<i32: 0>} : vector<8x256xi32>
      %88 = vector.broadcast %86 : vector<1x256xf32> to vector<8x256xf32>
      %89 = arith.cmpf oeq, %58, %88 : vector<8x256xf32>
      %c8_i32 = arith.constant 8 : i32
      %90 = vector.broadcast %c8_i32 : i32 to vector<8x256xi32>
      %91 = arith.select %89, %87, %90 : vector<8x256xi1>, vector<8x256xi32>
      %cst_22 = arith.constant dense<2147483647> : vector<256xi32>
      %92 = vector.multi_reduction <minsi>, %91, %cst_22 [0] : vector<8x256xi32> to vector<256xi32>
      %93 = vector.shape_cast %92 : vector<256xi32> to vector<1x256xi32>
      %94 = vector.broadcast %2 : f32 to vector<1x256xf32>
      %95 = arith.cmpf oge, %86, %94 : vector<1x256xf32>
      %96 = arith.ori %84, %95 : vector<1x256xi1>
      %97 = vector.broadcast %3 : f32 to vector<1x256xf32>
      %98 = arith.cmpf ole, %86, %97 : vector<1x256xf32>
      %c0_i32_23 = arith.constant 0 : i32
      %c-1_i32 = arith.constant -1 : i32
      %99 = vector.broadcast %c0_i32_23 : i32 to vector<1x256xi32>
      %100 = vector.broadcast %c-1_i32 : i32 to vector<1x256xi32>
      %101 = arith.select %98, %99, %100 : vector<1x256xi1>, vector<1x256xi32>
      %c1_i32_24 = arith.constant 1 : i32
      %102 = vector.broadcast %c1_i32_24 : i32 to vector<1x256xi32>
      %103 = arith.select %96, %102, %101 : vector<1x256xi1>, vector<1x256xi32>
      %c-1_i32_25 = arith.constant -1 : i32
      %104 = vector.broadcast %c-1_i32_25 : i32 to vector<1x256xi32>
      %105 = arith.select %21, %103, %104 : vector<1x256xi1>, vector<1x256xi32>
      %c0_26 = arith.constant 0 : index
      %c0_27 = arith.constant 0 : index
      %106 = vector.load %arg6[%c0_26, %c0_27] : memref<1x256xi32, #tpu.memory_space<vmem>>, vector<1x256xi32>
      tpu.vector_store %arg6[%c0_26, %c0_27], %105 {strides = array<i32>} : memref<1x256xi32, #tpu.memory_space<vmem>>, vector<1x256xi32>,
      %107 = vector.broadcast %93 : vector<1x256xi32> to vector<8x256xi32>
      %108 = arith.cmpi eq, %87, %107 : vector<8x256xi32>
      %cst_28 = arith.constant -3.400000e+38 : f32
      %109 = vector.shape_cast %22 : vector<8x1xf32> to vector<8x1xf32>
      %110 = vector.broadcast %109 : vector<8x1xf32> to vector<8x256xf32>
      %111 = vector.broadcast %cst_28 : f32 to vector<8x256xf32>
      %112 = arith.select %108, %110, %111 : vector<8x256xi1>, vector<8x256xf32>
      %cst_29 = arith.constant dense<0xFF800000> : vector<256xf32>
      %113 = vector.multi_reduction <maximumf>, %112, %cst_29 [0] : vector<8x256xf32> to vector<256xf32>
      %114 = vector.shape_cast %113 : vector<256xf32> to vector<1x256xf32>
      %cst_30 = arith.constant -3.400000e+38 : f32
      %115 = vector.shape_cast %23 : vector<8x1xf32> to vector<8x1xf32>
      %116 = vector.broadcast %115 : vector<8x1xf32> to vector<8x256xf32>
      %117 = vector.broadcast %cst_30 : f32 to vector<8x256xf32>
      %118 = arith.select %108, %116, %117 : vector<8x256xi1>, vector<8x256xf32>
      %cst_31 = arith.constant dense<0xFF800000> : vector<256xf32>
      %119 = vector.multi_reduction <maximumf>, %118, %cst_31 [0] : vector<8x256xf32> to vector<256xf32>
      %120 = vector.shape_cast %119 : vector<256xf32> to vector<1x256xf32>
      %cst_32 = arith.constant -3.400000e+38 : f32
      %121 = vector.shape_cast %24 : vector<8x1xf32> to vector<8x1xf32>
      %122 = vector.broadcast %121 : vector<8x1xf32> to vector<8x256xf32>
      %123 = vector.broadcast %cst_32 : f32 to vector<8x256xf32>
      %124 = arith.select %108, %122, %123 : vector<8x256xi1>, vector<8x256xf32>
      %cst_33 = arith.constant dense<0xFF800000> : vector<256xf32>
      %125 = vector.multi_reduction <maximumf>, %124, %cst_33 [0] : vector<8x256xf32> to vector<256xf32>
      %126 = vector.shape_cast %125 : vector<256xf32> to vector<1x256xf32>
      %cst_34 = arith.constant -3.400000e+38 : f32
      %127 = vector.shape_cast %25 : vector<8x1xf32> to vector<8x1xf32>
      %128 = vector.broadcast %127 : vector<8x1xf32> to vector<8x256xf32>
      %129 = vector.broadcast %cst_34 : f32 to vector<8x256xf32>
      %130 = arith.select %108, %128, %129 : vector<8x256xi1>, vector<8x256xf32>
      %cst_35 = arith.constant dense<0xFF800000> : vector<256xf32>
      %131 = vector.multi_reduction <maximumf>, %130, %cst_35 [0] : vector<8x256xf32> to vector<256xf32>
      %132 = vector.shape_cast %131 : vector<256xf32> to vector<1x256xf32>
      %133 = arith.subf %9, %7 : vector<1x256xf32>
      %134 = arith.subf %10, %8 : vector<1x256xf32>
      %cst_36 = arith.constant 5.000000e-01 : f32
      %135 = vector.broadcast %cst_36 : f32 to vector<1x256xf32>
      %136 = arith.mulf %135, %133 : vector<1x256xf32>
      %137 = arith.addf %7, %136 : vector<1x256xf32>
      %cst_37 = arith.constant 5.000000e-01 : f32
      %138 = vector.broadcast %cst_37 : f32 to vector<1x256xf32>
      %139 = arith.mulf %138, %134 : vector<1x256xf32>
      %140 = arith.addf %8, %139 : vector<1x256xf32>
      %141 = arith.subf %126, %114 : vector<1x256xf32>
      %142 = arith.subf %132, %120 : vector<1x256xf32>
      %cst_38 = arith.constant 5.000000e-01 : f32
      %143 = vector.broadcast %cst_38 : f32 to vector<1x256xf32>
      %144 = arith.mulf %143, %141 : vector<1x256xf32>
      %145 = arith.addf %114, %144 : vector<1x256xf32>
      %cst_39 = arith.constant 5.000000e-01 : f32
      %146 = vector.broadcast %cst_39 : f32 to vector<1x256xf32>
      %147 = arith.mulf %146, %142 : vector<1x256xf32>
      %148 = arith.addf %120, %147 : vector<1x256xf32>
      %cst_40 = arith.constant 9.99999993E-9 : f32
      %149 = vector.broadcast %cst_40 : f32 to vector<1x256xf32>
      %150 = arith.maximumf %133, %149 : vector<1x256xf32>
      %151 = tpu.reciprocal %150 {approx = true} : vector<1x256xf32> -> vector<1x256xf32>
      %cst_41 = arith.constant 9.99999993E-9 : f32
      %152 = vector.broadcast %cst_41 : f32 to vector<1x256xf32>
      %153 = arith.maximumf %134, %152 : vector<1x256xf32>
      %154 = tpu.reciprocal %153 {approx = true} : vector<1x256xf32> -> vector<1x256xf32>
      %155 = arith.subf %145, %137 : vector<1x256xf32>
      %156 = arith.mulf %155, %151 : vector<1x256xf32>
      %157 = arith.subf %148, %140 : vector<1x256xf32>
      %158 = arith.mulf %157, %154 : vector<1x256xf32>
      %cst_42 = arith.constant 9.99999993E-9 : f32
      %159 = vector.broadcast %cst_42 : f32 to vector<1x256xf32>
      %160 = arith.maximumf %141, %159 : vector<1x256xf32>
      %161 = arith.mulf %160, %151 : vector<1x256xf32>
      %162 = math.log %161 : vector<1x256xf32>
      %cst_43 = arith.constant 9.99999993E-9 : f32
      %163 = vector.broadcast %cst_43 : f32 to vector<1x256xf32>
      %164 = arith.maximumf %142, %163 : vector<1x256xf32>
      %165 = arith.mulf %164, %154 : vector<1x256xf32>
      %166 = math.log %165 : vector<1x256xf32>
      %cst_44 = arith.constant 0.000000e+00 : f32
      %167 = vector.broadcast %cst_44 : f32 to vector<1x256xf32>
      %168 = arith.select %21, %156, %167 : vector<1x256xi1>, vector<1x256xf32>
      %c0_45 = arith.constant 0 : index
      %c0_46 = arith.constant 0 : index
      %169 = vector.load %arg7[%c0_45, %c0_46] : memref<4x256xf32, #tpu.memory_space<vmem>>, vector<1x256xf32>
      tpu.vector_store %arg7[%c0_45, %c0_46], %168 {strides = array<i32>} : memref<4x256xf32, #tpu.memory_space<vmem>>, vector<1x256xf32>,
      %170 = arith.select %21, %158, %167 : vector<1x256xi1>, vector<1x256xf32>
      %c1_47 = arith.constant 1 : index
      %c0_48 = arith.constant 0 : index
      %171 = vector.load %arg7[%c1_47, %c0_48] : memref<4x256xf32, #tpu.memory_space<vmem>>, vector<1x256xf32>
      tpu.vector_store %arg7[%c1_47, %c0_48], %170 {strides = array<i32>} : memref<4x256xf32, #tpu.memory_space<vmem>>, vector<1x256xf32>,
      %172 = arith.select %21, %162, %167 : vector<1x256xi1>, vector<1x256xf32>
      %c2_49 = arith.constant 2 : index
      %c0_50 = arith.constant 0 : index
      %173 = vector.load %arg7[%c2_49, %c0_50] : memref<4x256xf32, #tpu.memory_space<vmem>>, vector<1x256xf32>
      tpu.vector_store %arg7[%c2_49, %c0_50], %172 {strides = array<i32>} : memref<4x256xf32, #tpu.memory_space<vmem>>, vector<1x256xf32>,
      %174 = arith.select %21, %166, %167 : vector<1x256xi1>, vector<1x256xf32>
      %c3_51 = arith.constant 3 : index
      %c0_52 = arith.constant 0 : index
      %175 = vector.load %arg7[%c3_51, %c0_52] : memref<4x256xf32, #tpu.memory_space<vmem>>, vector<1x256xf32>
      tpu.vector_store %arg7[%c3_51, %c0_52], %174 {strides = array<i32>} : memref<4x256xf32, #tpu.memory_space<vmem>>, vector<1x256xf32>,
    } else {
    }
    return
  }
  func.func @transform_0(%arg0: i32, %arg1: i32) -> i32 {
    %c0_i32 = arith.constant 0 : i32
    %c0_i32_0 = arith.constant 0 : i32
    return %c0_i32 : i32
  }
  func.func @transform_1(%arg0: i32, %arg1: i32) -> i32 {
    %c0_i32 = arith.constant 0 : i32
    %c0_i32_0 = arith.constant 0 : i32
    return %c0_i32 : i32
  }
  func.func @transform_2(%arg0: i32, %arg1: i32) -> (i32, i32) {
    %c0_i32 = arith.constant 0 : i32
    %c0_i32_0 = arith.constant 0 : i32
    return %c0_i32, %arg1 : i32, i32
  }
  func.func @transform_3(%arg0: i32, %arg1: i32) -> (i32, i32) {
    %c0_i32 = arith.constant 0 : i32
    %c0_i32_0 = arith.constant 0 : i32
    %c0_i32_1 = arith.constant 0 : i32
    return %c0_i32, %c0_i32_0 : i32, i32
  }
  func.func @transform_4(%arg0: i32, %arg1: i32) -> (i32, i32) {
    %c0_i32 = arith.constant 0 : i32
    %c0_i32_0 = arith.constant 0 : i32
    return %c0_i32, %arg1 : i32, i32
  }
  func.func @transform_5(%arg0: i32, %arg1: i32) -> (i32, i32) {
    %c0_i32 = arith.constant 0 : i32
    %c0_i32_0 = arith.constant 0 : i32
    return %c0_i32, %arg1 : i32, i32
  }
}

</mosaic_0001>

<llo_original>
// kernel: tpu_custom_call.1
$region0: #{tpu_custom_call.1}
  #allocation0 [shape = 'u32[]', space=smem, size = 0x4, offset = 0x4, fixed_abs, tag = 'smem constant byte address 0x4 - core index']
  #allocation1 [shape = 'u32[144,128]{1,0:T(1,128)}', space=vmem, size = 0x12000, scoped, tag = 'internal scratch']
  #allocation2 [shape = 'f32[8,1]{1,0:T(8,128)}', space=vmem, size = 0x1000, scoped, tag = 'scratch operand']
  #allocation3 [shape = 's32[1]{0:T(128)S(6)}', space=smem, size = 0x200, scoped, tag = 'scoped memory for tpu_custom_call.1']
  %s0 = inlined_call_operand.vmem [shape: f32[4], index: 0, kind: input, shape index: {}]
  %s1 = inlined_call_operand.<no memory space> [shape: s32[1], index: 1, kind: input, shape index: {}]
  %s2 = inlined_call_operand.hbm [shape: f32[4,768], index: 2, kind: input, shape index: {}]
  %s3 = inlined_call_operand.vmem [shape: f32[8,4], index: 3, kind: input, shape index: {}]
  %s4 = inlined_call_operand.hbm [shape: s32[1,768], index: 4, kind: output, shape index: {0}]
  %s5 = inlined_call_operand.hbm [shape: f32[4,768], index: 5, kind: output, shape index: {1}]
  %6 = xla_tuple %s4, %s5
  %s7 = sld [smem:[#allocation0]]
  $region77: #{tpu_custom_call.1} parent=0
    _
  %s9 = ssub.s32 1, %s7
  %s10 = scalar_select 0, %s9, %s7
  %11 = sst [smem:[#allocation3]] %s1
  $region1: #{tpu_custom_call.1} parent=0
    #allocation4 [shape = 'u8[512]{0}', space=smem, size = 0x200, scoped, tag = 'input window, operand 0, single buffered']
    #allocation5 [shape = 's32[2]{0}', space=sflag, size = 0x8, scoped, tag = 'scoped memory for tpu_custom_call.1']
    #allocation6 [shape = 's32[2]{0}', space=sflag, size = 0x8, scoped, tag = 'scoped memory for tpu_custom_call.1']
    #allocation7 [shape = 's32[2]{0}', space=sflag, size = 0x8, scoped, tag = 'scoped memory for tpu_custom_call.1']
    #allocation8 [shape = 'u8[8192]{0}', space=vmem, size = 0x2000, scoped, tag = 'input window, operand 2']
    #allocation9 [shape = 'u8[2048]{0}', space=vmem, size = 0x800, scoped, tag = 'output window, operand 0']
    #allocation10 [shape = 'u8[8192]{0}', space=vmem, size = 0x2000, scoped, tag = 'output window, operand 1']
    #allocation11 [shape = 's32[2]{0}', space=sflag, size = 0x8, scoped, tag = 'scoped memory for tpu_custom_call.1']
    %12 = vsyncpa [#allocation7], 0
    %13 = vsyncpa [#allocation5], 0
    %s14 = scalar_lea.sflag [#allocation5], 1
    %15 = vsyncpa %s14, 0
    %16 = vsyncpa [#allocation6], 0
    %s17 = scalar_lea.sflag [#allocation6], 1
    %18 = vsyncpa %s17, 0
    %19 = vsyncpa [#allocation11], 0
    %s20 = scalar_lea.sflag [#allocation11], 1
    %21 = vsyncpa %s20, 0
    loop: start=0, step=1, limit=8
    $region2: #{tpu_custom_call.1} parent=1 // loop_pre_header
      _
    $region3: #{tpu_custom_call.1} parent=1 // loop_header
      %s23 = sphi 0, %s27
      %p24 = scmp.ge.s32.totalorder %s23, 8
      %s30 = sphi 0, %s42
      %s31 = sphi 0, %s38
      %s32 = sphi 0, %s30
      %s33 = sphi 0, %s31
      %s34 = sphi 0, %s32
      %s35 = sphi 0, %s33
      %s43 = sphi 0, %s43
      %s45 = sphi 0, %s43
      %s46 = sphi 0, %s45
      %s60 = sphi 0, %s46
      %s64 = sphi 0, %s64
      %s66 = sphi 0, %s64
      %s67 = sphi 0, %s66
      %s81 = sphi 0, %s67
      %s87 = sphi 0, %s89
      %s90 = sphi 0, %s87
      %s91 = sphi 0, %s90
      %s107 = sphi 0, %s91
      %s111 = sphi 0, %s111
      %s113 = sphi 0, %s111
      %s114 = sphi 0, %s113
      %s128 = sphi 0, %s114
      %s134 = sphi 0, %s136
      %s137 = sphi 0, %s134
      %s138 = sphi 0, %s137
      %s154 = sphi 0, %s138
      %s160 = sphi 0, %s162
      %s163 = sphi 0, %s160
      %s164 = sphi 0, %s163
      %s180 = sphi 0, %s164
    $region4: #{tpu_custom_call.1} parent=1 // loop_header_branch
      %26 = sbr.rel (%p24) target = $region8
    $region5: #{tpu_custom_call.1} parent=1 // loop_body
      %s28 = ssub.s32 %s23, 1
      %s29 = ssub.s32 %s23, 2
      %s36 = sadd.s32 1, %s31
      %p37 = scmp.ge.s32.totalorder %s36, 3
      %s38 = scalar_select %p37, 0, %s36
      %s39 = sadd.s32 1, %s30
      %s40 = scalar_select %p37, %s39, %s30
      %p41 = scmp.ge.s32.totalorder %s40, 2
      %s42 = scalar_select %p41, 0, %s40
      %s44 = sadd.s32 %s43, 1
      %p47 = scmp.eq.s32.totalorder %s23, 5
      %p48 = scmp.ne.s32.totalorder %s43, %s45
      %p49 = scmp.eq.s32.totalorder %s23, 0
      %p50 = por %p48, %p49
      %p51 = scmp.ne.s32.totalorder %s43, %s45
      %p52 = scmp.eq.s32.totalorder %s28, 5
      %p53 = por %p51, %p52
      %p54 = scmp.ne.s32.totalorder %s45, %s46
      %p55 = scmp.eq.s32.totalorder %s28, 0
      %p56 = por %p54, %p55
      %p57 = scmp.ne.s32.totalorder %s45, %s46
      %p58 = scmp.eq.s32.totalorder %s29, 5
      %p59 = por %p57, %p58
      %p61 = scmp.ne.s32.totalorder %s46, %s60
      %p62 = scmp.eq.s32.totalorder %s29, 0
      %p63 = por %p61, %p62
      %s65 = sadd.s32 %s64, 1
      %p68 = scmp.eq.s32.totalorder %s23, 5
      %p69 = scmp.ne.s32.totalorder %s64, %s66
      %p70 = scmp.eq.s32.totalorder %s23, 0
      %p71 = por %p69, %p70
      %p72 = scmp.ne.s32.totalorder %s64, %s66
      %p73 = scmp.eq.s32.totalorder %s28, 5
      %p74 = por %p72, %p73
      %p75 = scmp.ne.s32.totalorder %s66, %s67
      %p76 = scmp.eq.s32.totalorder %s28, 0
      %p77 = por %p75, %p76
      %p78 = scmp.ne.s32.totalorder %s66, %s67
      %p79 = scmp.eq.s32.totalorder %s29, 5
      %p80 = por %p78, %p79
      %p82 = scmp.ne.s32.totalorder %s67, %s81
      %p83 = scmp.eq.s32.totalorder %s29, 0
      %p84 = por %p82, %p83
      %s85 = ssub.s32 %s31, %s38
      %p86 = scmp.eq.s32.totalorder %s85, 0
      %s88 = sadd.s32 %s87, 1
      %s89 = scalar_select %p86, %s87, %s88
      %p92 = pneg %p86
      %p93 = scmp.eq.s32.totalorder %s23, 5
      %p94 = por %p92, %p93
      %p95 = scmp.ne.s32.totalorder %s87, %s90
      %p96 = scmp.eq.s32.totalorder %s23, 0
      %p97 = por %p95, %p96
      %p98 = scmp.ne.s32.totalorder %s87, %s90
      %p99 = scmp.eq.s32.totalorder %s28, 5
      %p100 = por %p98, %p99
      %p101 = scmp.ne.s32.totalorder %s90, %s91
      %p102 = scmp.eq.s32.totalorder %s28, 0
      %p103 = por %p101, %p102
      %p104 = scmp.ne.s32.totalorder %s90, %s91
      %p105 = scmp.eq.s32.totalorder %s29, 5
      %p106 = por %p104, %p105
      %p108 = scmp.ne.s32.totalorder %s91, %s107
      %p109 = scmp.eq.s32.totalorder %s29, 0
      %p110 = por %p108, %p109
      %s112 = sadd.s32 %s111, 1
      %p115 = scmp.eq.s32.totalorder %s23, 5
      %p116 = scmp.ne.s32.totalorder %s111, %s113
      %p117 = scmp.eq.s32.totalorder %s23, 0
      %p118 = por %p116, %p117
      %p119 = scmp.ne.s32.totalorder %s111, %s113
      %p120 = scmp.eq.s32.totalorder %s28, 5
      %p121 = por %p119, %p120
      %p122 = scmp.ne.s32.totalorder %s113, %s114
      %p123 = scmp.eq.s32.totalorder %s28, 0
      %p124 = por %p122, %p123
      %p125 = scmp.ne.s32.totalorder %s113, %s114
      %p126 = scmp.eq.s32.totalorder %s29, 5
      %p127 = por %p125, %p126
      %p129 = scmp.ne.s32.totalorder %s114, %s128
      %p130 = scmp.eq.s32.totalorder %s29, 0
      %p131 = por %p129, %p130
      %s132 = ssub.s32 %s31, %s38
      %p133 = scmp.eq.s32.totalorder %s132, 0
      %s135 = sadd.s32 %s134, 1
      %s136 = scalar_select %p133, %s134, %s135
      %p139 = pneg %p133
      %p140 = scmp.eq.s32.totalorder %s23, 5
      %p141 = por %p139, %p140
      %p142 = scmp.ne.s32.totalorder %s134, %s137
      %p143 = scmp.eq.s32.totalorder %s23, 0
      %p144 = por %p142, %p143
      %p145 = scmp.ne.s32.totalorder %s134, %s137
      %p146 = scmp.eq.s32.totalorder %s28, 5
      %p147 = por %p145, %p146
      %p148 = scmp.ne.s32.totalorder %s137, %s138
      %p149 = scmp.eq.s32.totalorder %s28, 0
      %p150 = por %p148, %p149
      %p151 = scmp.ne.s32.totalorder %s137, %s138
      %p152 = scmp.eq.s32.totalorder %s29, 5
      %p153 = por %p151, %p152
      %p155 = scmp.ne.s32.totalorder %s138, %s154
      %p156 = scmp.eq.s32.totalorder %s29, 0
      %p157 = por %p155, %p156
      %s158 = ssub.s32 %s31, %s38
      %p159 = scmp.eq.s32.totalorder %s158, 0
      %s161 = sadd.s32 %s160, 1
      %s162 = scalar_select %p159, %s160, %s161
      %p165 = pneg %p159
      %p166 = scmp.eq.s32.totalorder %s23, 5
      %p167 = por %p165, %p166
      %p168 = scmp.ne.s32.totalorder %s160, %s163
      %p169 = scmp.eq.s32.totalorder %s23, 0
      %p170 = por %p168, %p169
      %p171 = scmp.ne.s32.totalorder %s160, %s163
      %p172 = scmp.eq.s32.totalorder %s28, 5
      %p173 = por %p171, %p172
      %p174 = scmp.ne.s32.totalorder %s163, %s164
      %p175 = scmp.eq.s32.totalorder %s28, 0
      %p176 = por %p174, %p175
      %p177 = scmp.ne.s32.totalorder %s163, %s164
      %p178 = scmp.eq.s32.totalorder %s29, 5
      %p179 = por %p177, %p178
      %p181 = scmp.ne.s32.totalorder %s164, %s180
      %p182 = scmp.eq.s32.totalorder %s29, 0
      %p183 = por %p181, %p182
      %p184 = scmp.le.s32.totalorder 1, %s23
      %p185 = scmp.lt.s32.totalorder %s23, 7
      %p186 = pnand %p184, %p185
      %p187 = pneg %p186
      // Predicated region
      $region9: #{tpu_custom_call.1} parent=5 // pred_check
        _
      $region10: #{tpu_custom_call.1} parent=5 // pred_check_branch
        %189 = sbr.rel (%p186) target = $region12
      $region11: #{tpu_custom_call.1} parent=5 // pred_region
        %s190 = ssub.s32 %s23, 1
        // Predicated region
        $region13: #{tpu_custom_call.1} parent=11 // pred_check
          %p191 = pneg %p56
        $region14: #{tpu_custom_call.1} parent=11 // pred_check_branch
          %193 = sbr.rel (%p191) target = $region16
        $region15: #{tpu_custom_call.1} parent=11 // pred_region
          %s195 = ssub.s32 16, 16
          %196 = vsyncadd [#allocation7], %s195
          %s198 = sshll.u32 %s0, 4
          %s199 = int_to_ptr.vmem [resolvable:$true] %s198
          %201 = dma.vmem_to_smem %s199, 16, [#allocation4], [#allocation7]
        $region16: #{tpu_custom_call.1} parent=11 // pred_fallthru
          _
        // Predicated region
        $region17: #{tpu_custom_call.1} parent=11 // pred_check
          %p202 = pneg %p77
        $region18: #{tpu_custom_call.1} parent=11 // pred_check_branch
          %204 = sbr.rel (%p202) target = $region20
        $region19: #{tpu_custom_call.1} parent=11 // pred_region
          _
        $region20: #{tpu_custom_call.1} parent=11 // pred_fallthru
          _
        // Predicated region
        $region21: #{tpu_custom_call.1} parent=11 // pred_check
          %p205 = pneg %p124
        $region22: #{tpu_custom_call.1} parent=11 // pred_check_branch
          %207 = sbr.rel (%p205) target = $region24
        $region23: #{tpu_custom_call.1} parent=11 // pred_region
          _
        $region24: #{tpu_custom_call.1} parent=11 // pred_fallthru
          _
      $region12: #{tpu_custom_call.1} parent=5 // pred_fallthru
        _
      %p208 = scmp.lt.s32.totalorder %s23, 6
      // Predicated region
      $region25: #{tpu_custom_call.1} parent=5 // pred_check
        %p209 = pneg %p208
      $region26: #{tpu_custom_call.1} parent=5 // pred_check_branch
        %211 = sbr.rel (%p209) target = $region28
      $region27: #{tpu_custom_call.1} parent=5 // pred_region
        // Predicated region
        $region29: #{tpu_custom_call.1} parent=27 // pred_check
          %p212 = pneg %p97
        $region30: #{tpu_custom_call.1} parent=27 // pred_check_branch
          %214 = sbr.rel (%p212) target = $region32
        $region31: #{tpu_custom_call.1} parent=27 // pred_region
          %s215 = sand.u32 %s87, 1
          %s216 = scalar_lea.sflag [#allocation5], %s215
          %s217 = sand.u32 %s87, 1
          %s218 = smul.addr %s217, 8
          %s219 = scalar_lea.vmem [#allocation8], %s218
          %s220 = smul.u32 2, %s31
          %s222 = ssub.s32 128, 128
          %223 = vsyncadd %s216, %s222
          %s224 = smul.addr %s220, 64
          %s225 = scalar_lea.hbm %s2, %s224
          %s227 = sshll.u32 %s219, 4
          %s228 = int_to_ptr.vmem [resolvable:$true] %s227
          %230 = dma.hbm_to_vmem [thread:$0]  %s225, 128, %s228, %s216
        $region32: #{tpu_custom_call.1} parent=27 // pred_fallthru
          _
      $region28: #{tpu_custom_call.1} parent=5 // pred_fallthru
        _
      %p231 = scmp.le.s32.totalorder 1, %s23
      %p232 = scmp.lt.s32.totalorder %s23, 7
      %p233 = pnand %p231, %p232
      %p234 = pneg %p233
      // Predicated region
      $region33: #{tpu_custom_call.1} parent=5 // pred_check
        _
      $region34: #{tpu_custom_call.1} parent=5 // pred_check_branch
        %236 = sbr.rel (%p233) target = $region36
      $region35: #{tpu_custom_call.1} parent=5 // pred_region
        %s237 = ssub.s32 %s23, 1
        // Predicated region
        $region37: #{tpu_custom_call.1} parent=35 // pred_check
          %p238 = pneg %p56
        $region38: #{tpu_custom_call.1} parent=35 // pred_check_branch
          %240 = sbr.rel (%p238) target = $region40
        $region39: #{tpu_custom_call.1} parent=35 // pred_region
          %241 = dma.done [#allocation7], 16
        $region40: #{tpu_custom_call.1} parent=35 // pred_fallthru
          _
        %s242 = sand.u32 %s90, 1
        %s243 = scalar_lea.sflag [#allocation5], %s242
        %s244 = sand.u32 %s90, 1
        %s245 = smul.addr %s244, 8
        %s246 = scalar_lea.vmem [#allocation8], %s245
        // Predicated region
        $region41: #{tpu_custom_call.1} parent=35 // pred_check
          %p247 = pneg %p103
        $region42: #{tpu_custom_call.1} parent=35 // pred_check_branch
          %249 = sbr.rel (%p247) target = $region44
        $region43: #{tpu_custom_call.1} parent=35 // pred_region
          %250 = dma.done %s243, 128
        $region44: #{tpu_custom_call.1} parent=35 // pred_fallthru
          _
        %251 = sfence
        %p252 = pneg %p56
        %p253 = pneg %p53
        %p254 = pneg %p77
        %p255 = pneg %p74
        %s256 = sand.u32 %s90, 1
        %s257 = scalar_lea.sflag [#allocation5], %s256
        %s258 = sand.u32 %s90, 1
        %s259 = smul.addr %s258, 8
        %s260 = scalar_lea.vmem [#allocation8], %s259
        %p261 = pneg %p103
        %p262 = pneg %p100
        %p263 = pneg %p124
        %p264 = pneg %p121
        %p265 = pneg %p150
        %p266 = pneg %p147
        %s267 = sand.u32 %s137, 1
        %s268 = scalar_lea.sflag [#allocation6], %s267
        %s269 = sand.u32 %s137, 1
        %s270 = smul.addr %s269, 2
        %s271 = scalar_lea.vmem [#allocation9], %s270
        %p272 = pneg %p176
        %p273 = pneg %p173
        %s274 = sand.u32 %s163, 1
        %s275 = scalar_lea.sflag [#allocation11], %s274
        %s276 = sand.u32 %s163, 1
        %s277 = smul.addr %s276, 8
        %s278 = scalar_lea.vmem [#allocation10], %s277
        %s279 = smul.u32 2, %s33
        %s280 = smul.u32 2, %s33
        %s281 = smul.u32 2, %s33
        %s282 = sld [smem:[#allocation4]]
        %s283 = sld [smem:[#allocation4 + $0x1]]
        %s284 = sld [smem:[#allocation4 + $0x2]]
        %s285 = sld [smem:[#allocation4 + $0x3]]
        %s286 = sld [smem:[#allocation3]]
        %v287 = vld [vmem:[%s246] sm:$0xff]
        %v288 = vld [vmem:[%s3] sm:$0xff]
        %vm289 = vcmp.ge.f32.partialorder %v287, 0.0
        %v290 = vsel %vm289, 1, 0
        %v291 = vrot.slane %v290, 5
        %v292 = vrot.slane %v291, 4
        %vm293 = vcmp.ne.s32.totalorder %v292, 0
        %vm294 = vmand %vm289, %vm293
        %v295 = vstv %s283
        %vm296 = vcmp.le.f32.partialorder %v287, %v295
        %v297 = vsel %vm296, 1, 0
        %v298 = vrot.slane %v297, 6
        %v299 = vrot.slane %v298, 4
        %vm300 = vcmp.ne.s32.totalorder %v299, 0
        %vm301 = vmand %vm294, %vm300
        %v302 = vstv %s282
        %vm303 = vcmp.le.f32.partialorder %v287, %v302
        %v304 = vsel %vm303, 1, 0
        %v305 = vrot.slane %v304, 7
        %v306 = vrot.slane %v305, 4
        %vm307 = vcmp.ne.s32.totalorder %v306, 0
        %vm308 = vmand %vm301, %vm307
        %310 = vset.pattern.permute.xlu0 0
        %311 = vperm.xlu0 %310, %v288
        %v312 = vpop.permute.xlu0 %311
        %v315 = vlaneseq
        %v316 = vshrl.u32 %v315, 7
        %v317 = vsub.s32 0, %v316
        %v318 = vrot.slane %v287, %v317
        %v319 = vlaneseq
        %v320 = vshrl.u32 %v319, 7
        %v321 = vsub.s32 4, %v320
        %v322 = vrot.slane %v287, %v321
        %v325 = vlaneseq
        %v326 = vshrl.u32 %v325, 7
        %v327 = vsub.s32 0, %v326
        %v328 = vrot.slane %v318, %v327
        %v329 = vlaneseq
        %v330 = vshrl.u32 %v329, 7
        %v331 = vsub.s32 0, %v330
        %v332 = vrot.slane %v322, %v331
        %v333 = vmax.f32 %v312, %v328
        %v334 = vmax.f32 %v312, %v332
        %335 = vset.pattern.permute.xlu0 1
        %336 = vperm.xlu0 %335, %v288
        %v337 = vpop.permute.xlu0 %336
        %v339 = vlaneseq
        %v340 = vshrl.u32 %v339, 7
        %v341 = vsub.s32 1, %v340
        %v342 = vrot.slane %v287, %v341
        %v343 = vlaneseq
        %v344 = vshrl.u32 %v343, 7
        %v345 = vsub.s32 5, %v344
        %v346 = vrot.slane %v287, %v345
        %v349 = vlaneseq
        %v350 = vshrl.u32 %v349, 7
        %v351 = vsub.s32 1, %v350
        %v352 = vrot.slane %v342, %v351
        %v353 = vlaneseq
        %v354 = vshrl.u32 %v353, 7
        %v355 = vsub.s32 1, %v354
        %v356 = vrot.slane %v346, %v355
        %v357 = vmax.f32 %v337, %v352
        %v358 = vmax.f32 %v337, %v356
        %359 = vset.pattern.permute.xlu0 2
        %360 = vperm.xlu0 %359, %v288
        %v361 = vpop.permute.xlu0 %360
        %v363 = vlaneseq
        %v364 = vshrl.u32 %v363, 7
        %v365 = vsub.s32 2, %v364
        %v366 = vrot.slane %v287, %v365
        %v367 = vlaneseq
        %v368 = vshrl.u32 %v367, 7
        %v369 = vsub.s32 6, %v368
        %v370 = vrot.slane %v287, %v369
        %v373 = vlaneseq
        %v374 = vshrl.u32 %v373, 7
        %v375 = vsub.s32 2, %v374
        %v376 = vrot.slane %v366, %v375
        %v377 = vlaneseq
        %v378 = vshrl.u32 %v377, 7
        %v379 = vsub.s32 2, %v378
        %v380 = vrot.slane %v370, %v379
        %v381 = vmin.f32 %v361, %v376
        %v382 = vmin.f32 %v361, %v380
        %383 = vset.pattern.permute.xlu0 3
        %384 = vperm.xlu0 %383, %v288
        %v385 = vpop.permute.xlu0 %384
        %v387 = vlaneseq
        %v388 = vshrl.u32 %v387, 7
        %v389 = vsub.s32 3, %v388
        %v390 = vrot.slane %v287, %v389
        %v391 = vlaneseq
        %v392 = vshrl.u32 %v391, 7
        %v393 = vsub.s32 7, %v392
        %v394 = vrot.slane %v287, %v393
        %v397 = vlaneseq
        %v398 = vshrl.u32 %v397, 7
        %v399 = vsub.s32 3, %v398
        %v400 = vrot.slane %v390, %v399
        %v401 = vlaneseq
        %v402 = vshrl.u32 %v401, 7
        %v403 = vsub.s32 3, %v402
        %v404 = vrot.slane %v394, %v403
        %v405 = vmin.f32 %v385, %v400
        %v406 = vmin.f32 %v385, %v404
        %v407 = vsub.f32 %v381, %v333
        %v408 = vsub.f32 %v382, %v334
        %v409 = vmax.f32 %v407, 0.0
        %v410 = vmax.f32 %v408, 0.0
        %v411 = vsub.f32 %v405, %v357
        %v412 = vsub.f32 %v406, %v358
        %v413 = vmax.f32 %v411, 0.0
        %v414 = vmax.f32 %v412, 0.0
        %v415 = vmul.f32 %v409, %v413
        %v416 = vmul.f32 %v410, %v414
        %v417 = vrot.slane %v287, 6
        %v419 = vsub.f32 %v287, %v417
        %v421 = vrot.slane %v419, 5
        %v422 = vrot.slane %v421, 4
        %v424 = vmul.f32 %v419, %v422
        %425 = vrot.lane.b32.xlu0 %v288, 2
        %v426 = vpop.permute.xlu0 %425
        %v428 = vsub.f32 %v288, %v426
        %430 = vrot.lane.b32.xlu0 %v428, 127
        %v431 = vpop.permute.xlu0 %430
        %v433 = vmul.f32 %v428, %v431
        %v435 = vlaneseq
        %v436 = vshrl.u32 %v435, 7
        %v437 = vsub.s32 2, %v436
        %v438 = vrot.slane %v424, %v437
        %v439 = vlaneseq
        %v440 = vshrl.u32 %v439, 7
        %v441 = vsub.s32 6, %v440
        %v442 = vrot.slane %v424, %v441
        %v445 = vlaneseq
        %v446 = vshrl.u32 %v445, 7
        %v447 = vsub.s32 2, %v446
        %v448 = vrot.slane %v438, %v447
        %v449 = vlaneseq
        %v450 = vshrl.u32 %v449, 7
        %v451 = vsub.s32 2, %v450
        %v452 = vrot.slane %v442, %v451
        %454 = vset.pattern.permute.xlu0 2
        %455 = vperm.xlu0 %454, %v433
        %v456 = vpop.permute.xlu0 %455
        %v458 = vadd.f32 %v448, %v456
        %v459 = vadd.f32 %v452, %v456
        %v460 = vsub.f32 %v458, %v415
        %v461 = vsub.f32 %v459, %v416
        %v462 = vadd.f32 %v460, 1e-08
        %v463 = vadd.f32 %v461, 1e-08
        %v464 = vrcp.pop %v462
        %v465 = vrcp.pop %v463
        %v466 = vmul.f32 %v415, %v464
        %v467 = vmul.f32 %v416, %v465
        %p468 = scmp.eq.s32.totalorder %s32, 0
        %p469 = scmp.eq.s32.totalorder %s33, 0
        %p470 = pnand %p468, %p469
        %p471 = pneg %p470
        // Predicated region
        $region45: #{tpu_custom_call.1} parent=35 // pred_check
          _
        $region46: #{tpu_custom_call.1} parent=35 // pred_check_branch
          %473 = sbr.rel (%p470) target = $region48
        $region47: #{tpu_custom_call.1} parent=35 // pred_region
          %vm474 = vcmask 7168
          %475 = vst.msk [vmem:[#allocation2] sm:$0xff] %vm474, -1.0
        $region48: #{tpu_custom_call.1} parent=35 // pred_fallthru
          _
        // Predicated region
        $region49: #{tpu_custom_call.1} parent=35 // pred_check
          %p476 = pneg %p468
        $region50: #{tpu_custom_call.1} parent=35 // pred_check_branch
          %478 = sbr.rel (%p476) target = $region52
        $region51: #{tpu_custom_call.1} parent=35 // pred_region
          %v479 = vsel %vm308, 1, 0
          %v480 = vlaneseq
          %v481 = vshrl.u32 %v480, 7
          %v482 = vsub.s32 0, %v481
          %v483 = vrot.slane %v479, %v482
          %v484 = vlaneseq
          %v485 = vshrl.u32 %v484, 7
          %v486 = vsub.s32 4, %v485
          %v487 = vrot.slane %v479, %v486
          %v488 = vlaneseq
          %v489 = vshrl.u32 %v488, 7
          %v490 = vsub.s32 0, %v489
          %v491 = vrot.slane %v483, %v490
          %v492 = vlaneseq
          %v493 = vshrl.u32 %v492, 7
          %v494 = vsub.s32 0, %v493
          %v495 = vrot.slane %v487, %v494
          %vm496 = vcmp.eq.s32.totalorder %v491, 1
          %vm497 = vcmp.eq.s32.totalorder %v495, 1
          %v498 = vsel %vm496, %v466, -1.0
          %v499 = vsel %vm497, %v467, -1.0
          %v500 = vmax.f32 %v498, %v499
          %501 = vmax.xlane.f32.xlu0 %v500
          %v502 = vpop.xlane.xlu0 %501
          %v503 = vld [vmem:[#allocation2] sm:$0xff]
          %v504 = vmax.f32 %v503, %v502
          %vm505 = vcmask 7168
          %506 = vst.msk [vmem:[#allocation2] sm:$0xff] %vm505, %v504
        $region52: #{tpu_custom_call.1} parent=35 // pred_fallthru
          _
        %p507 = scmp.eq.s32.totalorder %s32, 1
        // Predicated region
        $region53: #{tpu_custom_call.1} parent=35 // pred_check
          %p508 = pneg %p507
        $region54: #{tpu_custom_call.1} parent=35 // pred_check_branch
          %510 = sbr.rel (%p508) target = $region56
        $region55: #{tpu_custom_call.1} parent=35 // pred_region
          %v511 = vlaneseq
          %v512 = vshrl.u32 %v511, 7
          %v513 = vstv %s286
          %vm514 = vcmp.lt.s32.totalorder %v512, %v513
          %v515 = vld [vmem:[#allocation2] sm:$0xff]
          %v516 = vsel %vm514, %v515, 2.0
          %518 = vset.pattern.permute.xlu0 0
          %519 = vperm.xlu0 %518, %v516
          %v520 = vpop.permute.xlu0 %519
          %vm522 = vcmp.eq.f32.partialorder %v466, %v520
          %vm523 = vcmp.eq.f32.partialorder %v467, %v520
          %v524 = vsel %vm522, 1.0, 0.0
          %v525 = vsel %vm523, 1.0, 0.0
          %v526 = vrot.slane %v524, 4
          %v527 = vmax.f32 %v524, %v526
          %v528 = vrot.slane %v527, 2
          %v529 = vmax.f32 %v527, %v528
          %v530 = vrot.slane %v529, 1
          %v531 = vmax.f32 %v529, %v530
          %v532 = vrot.slane %v525, 4
          %v533 = vmax.f32 %v525, %v532
          %v534 = vrot.slane %v533, 2
          %v535 = vmax.f32 %v533, %v534
          %v536 = vrot.slane %v535, 1
          %v537 = vmax.f32 %v535, %v536
          %vm538 = vcmp.gt.f32.partialorder %v531, 0.0
          %vm539 = vcmp.gt.f32.partialorder %v537, 0.0
          %v540 = vrot.slane %v466, 4
          %v541 = vmax.f32 %v466, %v540
          %v542 = vrot.slane %v541, 2
          %v543 = vmax.f32 %v541, %v542
          %v544 = vrot.slane %v543, 1
          %v545 = vmax.f32 %v543, %v544
          %v546 = vrot.slane %v467, 4
          %v547 = vmax.f32 %v467, %v546
          %v548 = vrot.slane %v547, 2
          %v549 = vmax.f32 %v547, %v548
          %v550 = vrot.slane %v549, 1
          %v551 = vmax.f32 %v549, %v550
          %vm552 = vcmp.eq.f32.partialorder %v466, %v545
          %vm553 = vcmp.eq.f32.partialorder %v467, %v551
          %v554 = vsel %vm552, %v512, 8
          %v555 = vsel %vm553, %v512, 8
          %v556 = vrot.slane %v554, 4
          %vm557 = vcmp.lt.s32.totalorder %v554, %v556
          %v558 = vsel %vm557, %v554, %v556
          %v559 = vrot.slane %v558, 2
          %vm560 = vcmp.lt.s32.totalorder %v558, %v559
          %v561 = vsel %vm560, %v558, %v559
          %v562 = vrot.slane %v561, 1
          %vm563 = vcmp.lt.s32.totalorder %v561, %v562
          %v564 = vsel %vm563, %v561, %v562
          %v565 = vrot.slane %v555, 4
          %vm566 = vcmp.lt.s32.totalorder %v555, %v565
          %v567 = vsel %vm566, %v555, %v565
          %v568 = vrot.slane %v567, 2
          %vm569 = vcmp.lt.s32.totalorder %v567, %v568
          %v570 = vsel %vm569, %v567, %v568
          %v571 = vrot.slane %v570, 1
          %vm572 = vcmp.lt.s32.totalorder %v570, %v571
          %v573 = vsel %vm572, %v570, %v571
          %v574 = vstv %s284
          %vm575 = vcmp.ge.f32.partialorder %v545, %v574
          %vm576 = vcmp.ge.f32.partialorder %v551, %v574
          %vm577 = vmor %vm538, %vm575
          %vm578 = vmor %vm539, %vm576
          %v579 = vstv %s285
          %vm580 = vcmp.le.f32.partialorder %v545, %v579
          %vm581 = vcmp.le.f32.partialorder %v551, %v579
          %v582 = vsel %vm580, 0, 4294967295
          %v583 = vsel %vm581, 0, 4294967295
          %v584 = vsel %vm577, 1, %v582
          %v585 = vsel %vm578, 1, %v583
          %v586 = vcombine.low %v584, %v585
          %v587 = vsel %vm308, %v586, 4294967295
          %v589 = vunpack.c.l.s4 1966171168
          %v590 = vunpack.c.0.s8 %v589
          %v591 = vlaneseq
          %v592 = vshrl.u32 %v591, 7
          %v593 = vsub.s32 %v590, %v592
          %v594 = vrot.slane %v587, %v593
          %v596 = vunpack.c.l.s4 1966171168
          %v597 = vunpack.c.0.s8 %v596
          %v598 = vlaneseq
          %v599 = vshrl.u32 %v598, 7
          %v600 = vsub.s32 %v597, %v599
          %v601 = vrot.slane %v594, %v600
          %v602 = vlaneseq
          %vm603 = vcmp.ge.s32.totalorder %v602, 0
          %vm604 = vcmp.lt.s32.totalorder %v602, 256
          %vm605 = vmand %vm603, %vm604
          %606 = vst.msk [vmem:[%s271] sm:$0x3] %vm605, %v601
          %vm607 = vcmp.eq.s32.totalorder %v512, %v564
          %vm608 = vcmp.eq.s32.totalorder %v512, %v573
          %v609 = vsel %vm607, %v312, -3.4e+38
          %v610 = vsel %vm608, %v312, -3.4e+38
          %v611 = vrot.slane %v609, 4
          %v612 = vmax.f32 %v609, %v611
          %v613 = vrot.slane %v612, 2
          %v614 = vmax.f32 %v612, %v613
          %v615 = vrot.slane %v614, 1
          %v616 = vmax.f32 %v614, %v615
          %v617 = vrot.slane %v610, 4
          %v618 = vmax.f32 %v610, %v617
          %v619 = vrot.slane %v618, 2
          %v620 = vmax.f32 %v618, %v619
          %v621 = vrot.slane %v620, 1
          %v622 = vmax.f32 %v620, %v621
          %v623 = vsel %vm607, %v337, -3.4e+38
          %v624 = vsel %vm608, %v337, -3.4e+38
          %v625 = vrot.slane %v623, 4
          %v626 = vmax.f32 %v623, %v625
          %v627 = vrot.slane %v626, 2
          %v628 = vmax.f32 %v626, %v627
          %v629 = vrot.slane %v628, 1
          %v630 = vmax.f32 %v628, %v629
          %v631 = vrot.slane %v624, 4
          %v632 = vmax.f32 %v624, %v631
          %v633 = vrot.slane %v632, 2
          %v634 = vmax.f32 %v632, %v633
          %v635 = vrot.slane %v634, 1
          %v636 = vmax.f32 %v634, %v635
          %v637 = vsel %vm607, %v361, -3.4e+38
          %v638 = vsel %vm608, %v361, -3.4e+38
          %v639 = vrot.slane %v637, 4
          %v640 = vmax.f32 %v637, %v639
          %v641 = vrot.slane %v640, 2
          %v642 = vmax.f32 %v640, %v641
          %v643 = vrot.slane %v642, 1
          %v644 = vmax.f32 %v642, %v643
          %v645 = vrot.slane %v638, 4
          %v646 = vmax.f32 %v638, %v645
          %v647 = vrot.slane %v646, 2
          %v648 = vmax.f32 %v646, %v647
          %v649 = vrot.slane %v648, 1
          %v650 = vmax.f32 %v648, %v649
          %v651 = vsel %vm607, %v385, -3.4e+38
          %v652 = vsel %vm608, %v385, -3.4e+38
          %v653 = vrot.slane %v651, 4
          %v654 = vmax.f32 %v651, %v653
          %v655 = vrot.slane %v654, 2
          %v656 = vmax.f32 %v654, %v655
          %v657 = vrot.slane %v656, 1
          %v658 = vmax.f32 %v656, %v657
          %v659 = vrot.slane %v652, 4
          %v660 = vmax.f32 %v652, %v659
          %v661 = vrot.slane %v660, 2
          %v662 = vmax.f32 %v660, %v661
          %v663 = vrot.slane %v662, 1
          %v664 = vmax.f32 %v662, %v663
          %v665 = vmul.f32 %v419, 0.5
          %v667 = vrot.slane %v665, 6
          %v668 = vrot.slane %v667, 4
          %v670 = vadd.f32 %v287, %v668
          %v671 = vsub.f32 %v644, %v616
          %v672 = vsub.f32 %v650, %v622
          %v673 = vsub.f32 %v658, %v630
          %v674 = vsub.f32 %v664, %v636
          %v675 = vmul.f32 %v671, 0.5
          %v676 = vmul.f32 %v672, 0.5
          %v677 = vadd.f32 %v616, %v675
          %v678 = vadd.f32 %v622, %v676
          %v679 = vmul.f32 %v673, 0.5
          %v680 = vmul.f32 %v674, 0.5
          %v681 = vadd.f32 %v630, %v679
          %v682 = vadd.f32 %v636, %v680
          %v683 = vmax.f32 %v419, 1e-08
          %v684 = vrcp.pop %v683
          %v686 = vlaneseq
          %v687 = vshrl.u32 %v686, 7
          %v688 = vsub.s32 0, %v687
          %v689 = vrot.slane %v670, %v688
          %v690 = vlaneseq
          %v691 = vshrl.u32 %v690, 7
          %v692 = vsub.s32 4, %v691
          %v693 = vrot.slane %v670, %v692
          %v696 = vsub.f32 %v677, %v689
          %v697 = vsub.f32 %v678, %v693
          %v699 = vlaneseq
          %v700 = vshrl.u32 %v699, 7
          %v701 = vsub.s32 2, %v700
          %v702 = vrot.slane %v684, %v701
          %v703 = vlaneseq
          %v704 = vshrl.u32 %v703, 7
          %v705 = vsub.s32 6, %v704
          %v706 = vrot.slane %v684, %v705
          %v709 = vmul.f32 %v696, %v702
          %v710 = vmul.f32 %v697, %v706
          %v711 = vlaneseq
          %v712 = vshrl.u32 %v711, 7
          %v713 = vsub.s32 1, %v712
          %v714 = vrot.slane %v670, %v713
          %v715 = vlaneseq
          %v716 = vshrl.u32 %v715, 7
          %v717 = vsub.s32 5, %v716
          %v718 = vrot.slane %v670, %v717
          %v721 = vsub.f32 %v681, %v714
          %v722 = vsub.f32 %v682, %v718
          %v723 = vlaneseq
          %v724 = vshrl.u32 %v723, 7
          %v725 = vsub.s32 3, %v724
          %v726 = vrot.slane %v684, %v725
          %v727 = vlaneseq
          %v728 = vshrl.u32 %v727, 7
          %v729 = vsub.s32 7, %v728
          %v730 = vrot.slane %v684, %v729
          %v733 = vmul.f32 %v721, %v726
          %v734 = vmul.f32 %v722, %v730
          %v735 = vmax.f32 %v671, 1e-08
          %v736 = vmax.f32 %v672, 1e-08
          %v737 = vmul.f32 %v735, %v702
          %v738 = vmul.f32 %v736, %v706
          %v739 = vlog2.pop %v737
          %v740 = vmul.f32 %v739, 0.6931472
          %v741 = vlog2.pop %v738
          %v742 = vmul.f32 %v741, 0.6931472
          %v743 = vmax.f32 %v673, 1e-08
          %v744 = vmax.f32 %v674, 1e-08
          %v745 = vmul.f32 %v743, %v726
          %v746 = vmul.f32 %v744, %v730
          %v747 = vlog2.pop %v745
          %v748 = vmul.f32 %v747, 0.6931472
          %v749 = vlog2.pop %v746
          %v750 = vmul.f32 %v749, 0.6931472
          %v753 = vcombine.low %v709, %v710
          %v755 = vsel %vm308, %v753, 0.0
          %v758 = vunpack.c.l.s4 1966171168
          %v759 = vunpack.c.0.s8 %v758
          %v760 = vlaneseq
          %v761 = vshrl.u32 %v760, 7
          %v762 = vsub.s32 %v759, %v761
          %v763 = vrot.slane %v755, %v762
          %v765 = vunpack.c.l.s4 1966171168
          %v766 = vunpack.c.0.s8 %v765
          %v767 = vlaneseq
          %v768 = vshrl.u32 %v767, 7
          %v769 = vsub.s32 %v766, %v768
          %v770 = vrot.slane %v763, %v769
          %772 = vst.msk [vmem:[%s278] ss:$4 sm:$0x3] %vm605, %v770
          %v775 = vcombine.low %v733, %v734
          %v777 = vsel %vm308, %v775, 0.0
          %v780 = vunpack.c.l.s4 1966171168
          %v781 = vunpack.c.0.s8 %v780
          %v782 = vlaneseq
          %v783 = vshrl.u32 %v782, 7
          %v784 = vsub.s32 %v781, %v783
          %v785 = vrot.slane %v777, %v784
          %v787 = vunpack.c.l.s4 1966171168
          %v788 = vunpack.c.0.s8 %v787
          %v789 = vlaneseq
          %v790 = vshrl.u32 %v789, 7
          %v791 = vsub.s32 %v788, %v790
          %v792 = vrot.slane %v785, %v791
          %s794 = scalar_lea.vmem %s278, 1 [#allocation10]
          %795 = vst.msk [vmem:[%s794] ss:$4 sm:$0x3] %vm605, %v792
          %v798 = vcombine.low %v740, %v742
          %v800 = vsel %vm308, %v798, 0.0
          %v803 = vunpack.c.l.s4 1966171168
          %v804 = vunpack.c.0.s8 %v803
          %v805 = vlaneseq
          %v806 = vshrl.u32 %v805, 7
          %v807 = vsub.s32 %v804, %v806
          %v808 = vrot.slane %v800, %v807
          %v810 = vunpack.c.l.s4 1966171168
          %v811 = vunpack.c.0.s8 %v810
          %v812 = vlaneseq
          %v813 = vshrl.u32 %v812, 7
          %v814 = vsub.s32 %v811, %v813
          %v815 = vrot.slane %v808, %v814
          %s817 = scalar_lea.vmem %s278, 2 [#allocation10]
          %818 = vst.msk [vmem:[%s817] ss:$4 sm:$0x3] %vm605, %v815
          %v821 = vcombine.low %v748, %v750
          %v823 = vsel %vm308, %v821, 0.0
          %v826 = vunpack.c.l.s4 1966171168
          %v827 = vunpack.c.0.s8 %v826
          %v828 = vlaneseq
          %v829 = vshrl.u32 %v828, 7
          %v830 = vsub.s32 %v827, %v829
          %v831 = vrot.slane %v823, %v830
          %v833 = vunpack.c.l.s4 1966171168
          %v834 = vunpack.c.0.s8 %v833
          %v835 = vlaneseq
          %v836 = vshrl.u32 %v835, 7
          %v837 = vsub.s32 %v834, %v836
          %v838 = vrot.slane %v831, %v837
          %s840 = scalar_lea.vmem %s278, 3 [#allocation10]
          %841 = vst.msk [vmem:[%s840] ss:$4 sm:$0x3] %vm605, %v838
        $region56: #{tpu_custom_call.1} parent=35 // pred_fallthru
          _
        %s842 = sand.u32 %s137, 1
        %s843 = scalar_lea.sflag [#allocation6], %s842
        %s844 = sand.u32 %s137, 1
        %s845 = smul.addr %s844, 2
        %s846 = scalar_lea.vmem [#allocation9], %s845
        %s847 = sand.u32 %s163, 1
        %s848 = scalar_lea.sflag [#allocation11], %s847
        %s849 = sand.u32 %s163, 1
        %s850 = smul.addr %s849, 8
        %s851 = scalar_lea.vmem [#allocation10], %s850
        // Predicated region
        $region57: #{tpu_custom_call.1} parent=35 // pred_check
          %p852 = pneg %p147
        $region58: #{tpu_custom_call.1} parent=35 // pred_check_branch
          %854 = sbr.rel (%p852) target = $region60
        $region59: #{tpu_custom_call.1} parent=35 // pred_region
          %s855 = smul.u32 2, %s33
          %s857 = ssub.s32 32, 32
          %858 = vsyncadd %s843, %s857
          %s859 = smul.addr %s855, 16
          %s860 = scalar_lea.hbm %s4, %s859
          %s862 = sshll.u32 %s846, 4
          %s863 = int_to_ptr.vmem [resolvable:$true] %s862
          %865 = dma.vmem_to_hbm [thread:$0]  %s863, 32, %s860, %s843
        $region60: #{tpu_custom_call.1} parent=35 // pred_fallthru
          _
        // Predicated region
        $region61: #{tpu_custom_call.1} parent=35 // pred_check
          %p866 = pneg %p173
        $region62: #{tpu_custom_call.1} parent=35 // pred_check_branch
          %868 = sbr.rel (%p866) target = $region64
        $region63: #{tpu_custom_call.1} parent=35 // pred_region
          %s869 = smul.u32 2, %s33
          %s871 = ssub.s32 128, 128
          %872 = vsyncadd %s848, %s871
          %s873 = smul.addr %s869, 64
          %s874 = scalar_lea.hbm %s5, %s873
          %s876 = sshll.u32 %s851, 4
          %s877 = int_to_ptr.vmem [resolvable:$true] %s876
          %879 = dma.vmem_to_hbm [thread:$0]  %s877, 128, %s874, %s848
        $region64: #{tpu_custom_call.1} parent=35 // pred_fallthru
          _
      $region36: #{tpu_custom_call.1} parent=5 // pred_fallthru
        _
      %p880 = scmp.le.s32.totalorder 2, %s23
      // Predicated region
      $region65: #{tpu_custom_call.1} parent=5 // pred_check
        %p881 = pneg %p880
      $region66: #{tpu_custom_call.1} parent=5 // pred_check_branch
        %883 = sbr.rel (%p881) target = $region68
      $region67: #{tpu_custom_call.1} parent=5 // pred_region
        %s884 = ssub.s32 %s23, 2
        // Predicated region
        $region69: #{tpu_custom_call.1} parent=67 // pred_check
          %p885 = pneg %p153
        $region70: #{tpu_custom_call.1} parent=67 // pred_check_branch
          %887 = sbr.rel (%p885) target = $region72
        $region71: #{tpu_custom_call.1} parent=67 // pred_region
          %s888 = sand.u32 %s138, 1
          %s889 = scalar_lea.sflag [#allocation6], %s888
          %s890 = sand.u32 %s138, 1
          %s891 = smul.addr %s890, 2
          %s892 = scalar_lea.vmem [#allocation9], %s891
          %893 = dma.done %s889, 32
        $region72: #{tpu_custom_call.1} parent=67 // pred_fallthru
          _
        // Predicated region
        $region73: #{tpu_custom_call.1} parent=67 // pred_check
          %p894 = pneg %p179
        $region74: #{tpu_custom_call.1} parent=67 // pred_check_branch
          %896 = sbr.rel (%p894) target = $region76
        $region75: #{tpu_custom_call.1} parent=67 // pred_region
          %s897 = sand.u32 %s164, 1
          %s898 = scalar_lea.sflag [#allocation11], %s897
          %s899 = sand.u32 %s164, 1
          %s900 = smul.addr %s899, 8
          %s901 = scalar_lea.vmem [#allocation10], %s900
          %902 = dma.done %s898, 128
        $region76: #{tpu_custom_call.1} parent=67 // pred_fallthru
          _
      $region68: #{tpu_custom_call.1} parent=5 // pred_fallthru
        _
    $region6: #{tpu_custom_call.1} parent=1 // loop_footer
      %s27 = sadd.s32 1, %s23
    $region7: #{tpu_custom_call.1} parent=1 // loop_footer_branch
      %22 = sbr.rel target = $region3
    $region8: #{tpu_custom_call.1} parent=1 // loop_exit
      _
    %903 = vsyncpa [#allocation5], 1
    %s904 = scalar_lea.sflag [#allocation5], 1
    %905 = vsyncpa %s904, 1
    %906 = vsyncpa [#allocation6], 1
    %s907 = scalar_lea.sflag [#allocation6], 1
    %908 = vsyncpa %s907, 1
    %909 = vsyncpa [#allocation11], 1
    %s910 = scalar_lea.sflag [#allocation11], 1
    %911 = vsyncpa %s910, 1
    %912 = vsyncpa [#allocation7], 1
    %s913 = scalar_lea.sflag [#allocation7], 1
    %914 = vsyncpa %s913, 1

</llo_original>
